<compile_context>
chip_gen: v5e
topology: v5e:2x2
jax: 0.10.0
libtpu: 0.0.40
codegen_flags: <defaults>
</compile_context>

<pallas_src>
import jax
import jax.numpy as jnp
from jax import lax
from jax.experimental import pallas as pl
from jax.experimental.pallas import tpu as pltpu

TEMPERATURE = 0.07
BASE_TEMPERATURE = 0.07
EPS = 1e-12          # F.normalize eps
LANE = 128


def _l2norm(x):
    # F.normalize(x, dim=1): x / max(||x||, eps) == x * rsqrt(max(||x||^2, eps^2))
    ss = jnp.sum(x * x, axis=1, keepdims=True)
    return x * lax.rsqrt(jnp.maximum(ss, jnp.float32(EPS * EPS)))


def _round_up(x, m):
    return ((x + m - 1) // m) * m


def av_sync_kernel(v_ref, a_ref, pool_ref, mask_ref, out_ref):
    """One block of TB anchors; writes sum_t log_prob_pos[t] for the block.

    v_ref    : (TB, CP)  raw video rows for this anchor block
    a_ref    : (TB, CP)  already-normalized projected audio anchors (rows of the pool)
    pool_ref : (BP, CP)  full normalized projected audio pool (negative candidates)
    mask_ref : (TB, BP)  per-anchor negative COUNT mask (scatter-add of neg_idx)
    out_ref  : (1, 1, LANE) lane-dense partial sum for this block
    """
    f32 = jnp.float32
    v = v_ref[...].astype(f32)
    a = a_ref[...].astype(f32)
    pool = pool_ref[...].astype(f32)
    mask = mask_ref[...].astype(f32)

    # Positive similarity <audio_cl_norm, video_cl_norm> (video normalized in-kernel).
    v_n = _l2norm(v)
    pos = jnp.sum(a * v_n, axis=1, keepdims=True)                      # (TB, 1)

    # One similarity matmul against the whole pool (contract on the feature axis of
    # both operands -> no transpose materialized in front of the MXU).
    s = lax.dot_general(a, pool, (((1,), (1,)), ((), ())),
                        preferred_element_type=f32)                    # (TB, BP)

    # SupConLoss closed form.  All similarities are cosines of unit vectors (<= 1),
    # so a constant shift of 1/T stabilizes exactly like the reference's per-row max
    # (log-softmax is shift invariant; at T=0.07 the smallest term is ~4e-13, safe).
    inv_t = jnp.float32(1.0 / TEMPERATURE)
    exp_neg = jnp.exp(s * inv_t - inv_t)                               # (TB, BP) on EUP
    sum_exp_neg = jnp.sum(mask * exp_neg, axis=1, keepdims=True)       # (TB, 1)

    pos_logit = pos * inv_t - inv_t                                    # (TB, 1)
    log_prob_pos = pos_logit - jnp.log(jnp.exp(pos_logit) + sum_exp_neg)

    # Lane-dense partial-sum output for this block.
    out_ref[...] = jnp.broadcast_to(jnp.sum(log_prob_pos), out_ref.shape)


@jax.jit
def av_sync_forward(video, audio, W, b, neg_idx):
    """video: (B, C_out), audio: (B, C_in), W: (C_in, C_out) (x @ W layout),
    b: (C_out,), neg_idx: (B, n_neg) int32 indices into [0, B)."""
    B, c_out = video.shape
    n_neg = neg_idx.shape[1]

    # Hoisted pool projection: l2norm -> Linear -> l2norm, computed ONCE in XLA.
    a_pool = _l2norm(
        jnp.dot(_l2norm(audio.astype(jnp.float32)), W.astype(jnp.float32),
                preferred_element_type=jnp.float32)
        + b.astype(jnp.float32)[None, :])                              # (B, c_out)

    # Anchor block size / padded batch.  tb is a multiple of 8; bp a multiple of tb.
    tb = min(128, _round_up(B, 8))
    bp = _round_up(B, tb)
    grid = bp // tb

    # Lane padding for the feature dim (skip when already aligned).
    cp = max(LANE, _round_up(c_out, LANE))
    video_p = video.astype(jnp.float32)
    pool_p = a_pool
    if cp != c_out or bp != B:
        video_p = jnp.pad(video_p, ((0, bp - B), (0, cp - c_out)))
        pool_p = jnp.pad(pool_p, ((0, bp - B), (0, cp - c_out)))
    # Padded pool/video rows are all-zero -> padded anchors contribute exactly 0.

    # Per-anchor negative COUNT mask (scatter-ADD so duplicate samples stay correct).
    rows = jnp.broadcast_to(jnp.arange(B)[:, None], neg_idx.shape)
    mask = jnp.zeros((bp, bp), jnp.float32).at[rows, neg_idx.astype(jnp.int32)].add(1.0)

    # VMEM budget from the actual live set (double-buffered operands + intermediates),
    # 2x headroom, capped well inside v7x's 64 MiB physical VMEM.
    f32b = 4
    operands = 2 * f32b * (2 * tb * cp + bp * cp + tb * bp) + 2 * f32b * LANE
    interm = f32b * (3 * tb * bp + 6 * tb * cp)
    vmem_limit = int(min(48 * 2**20, max(16 * 2**20, 2 * (operands + interm))))

    partials = pl.pallas_call(
        av_sync_kernel,
        out_shape=jax.ShapeDtypeStruct((grid, 1, LANE), jnp.float32),
        grid=(grid,),
        in_specs=[
            pl.BlockSpec((tb, cp), lambda i: (i, 0)),   # raw video block
            pl.BlockSpec((tb, cp), lambda i: (i, 0)),   # anchor block = rows of the pool
            pl.BlockSpec((bp, cp), lambda i: (0, 0)),   # full normalized pool
            pl.BlockSpec((tb, bp), lambda i: (i, 0)),   # negative count mask block
        ],
        out_specs=pl.BlockSpec((1, 1, LANE), lambda i: (i, 0, 0)),
        compiler_params=pltpu.CompilerParams(
            dimension_semantics=("parallel",),          # megacore-splittable batch
            vmem_limit_bytes=vmem_limit,
        ),
    )(video_p, pool_p, pool_p, mask)

    loss_sum = jnp.sum(partials[:, 0, 0])
    return -(TEMPERATURE / BASE_TEMPERATURE) * loss_sum / B


def sample_neg_idxs(key, batch, n_neg):
    """JAX glue mimicking torch.multinomial(uniform, n_neg) without replacement,
    followed by the >= self-index shift (excludes the diagonal)."""
    keys = jax.random.split(key, batch)

    def per_row(k):
        return jax.random.choice(k, batch - 1, shape=(n_neg,), replace=False)

    neg = jax.vmap(per_row)(keys)                 # (B, n_neg) in [0, B-2]
    tszs = jnp.arange(batch)[:, None]
    neg = jnp.where(neg >= tszs, neg + 1, neg)    # skip self index
    return neg.astype(jnp.int32)


def reference_forward(video, audio, W, b, neg_idx):
    """Pure-JAX reference mirroring the PyTorch module (sqrt-normalize, gather,
    concat + row-max SupCon) for sanity checking."""
    def l2(x):
        n = jnp.sqrt(jnp.sum(x * x, axis=1, keepdims=True))
        return x / jnp.maximum(n, EPS)

    v_n = l2(video.astype(jnp.float32))
    a_n = l2(audio.astype(jnp.float32))
    a_cl_n = l2(a_n @ W + b[None, :])
    negs = a_cl_n[neg_idx]                                   # (B, Nneg, C)
    pos = jnp.sum(a_cl_n * v_n, axis=1, keepdims=True)       # (B, 1)
    neg_sims = jnp.einsum("bc,bnc->bn", a_cl_n, negs)        # (B, Nneg)
    sim = jnp.concatenate([pos, neg_sims], axis=1) / TEMPERATURE
    logits = sim - jnp.max(sim, axis=1, keepdims=True)
    log_prob = logits - jnp.log(jnp.sum(jnp.exp(logits), axis=1, keepdims=True))
    return -(TEMPERATURE / BASE_TEMPERATURE) * jnp.mean(log_prob[:, 0])


if __name__ == "__main__":
    key = jax.random.PRNGKey(0)
    k_v, k_a, k_w, k_b, k_neg = jax.random.split(key, 5)

    B = 8             # batch of (video, audio) pairs
    C_IN = 32         # audio feature dim (Linear in_channel)
    C_OUT = 32        # video feature dim (Linear out_channel)
    N_NEG = min(100, B // 2)   # matches the module's n_negatives

    video = jax.random.normal(k_v, (B, C_OUT), dtype=jnp.float32)
    audio = jax.random.normal(k_a, (B, C_IN), dtype=jnp.float32)

    bound = 1.0 / (C_IN ** 0.5)
    W = jax.random.uniform(k_w, (C_IN, C_OUT), jnp.float32, -bound, bound)
    b = jax.random.uniform(k_b, (C_OUT,), jnp.float32, -bound, bound)

    neg_idx = sample_neg_idxs(k_neg, B, N_NEG)

    loss = av_sync_forward(video, audio, W, b, neg_idx)
    jax.block_until_ready(loss)

    ref = reference_forward(video, audio, W, b, neg_idx)
    assert jnp.isfinite(loss), "kernel produced non-finite loss"
    assert jnp.allclose(loss, ref, rtol=1e-4, atol=1e-5), (loss, ref)

    print("KERNEL_OK")
</pallas_src>

<mosaic_0001>
module attributes {stable_mosaic.version = 11 : i64} {
  func.func @av_sync_kernel(%arg0: i32, %arg1: memref<8x128xf32, #tpu.memory_space<vmem>>, %arg2: memref<8x128xf32, #tpu.memory_space<vmem>>, %arg3: memref<8x128xf32, #tpu.memory_space<vmem>>, %arg4: memref<8x8xf32, #tpu.memory_space<vmem>>, %arg5: memref<1x1x128xf32, #tpu.memory_space<vmem>>) attributes {dimension_semantics = [#tpu.dimension_semantics<parallel>], iteration_bounds = array<i64: 1>, scalar_prefetch = 0 : i64, scratch_operands = 0 : i64, tpu.core_type = #tpu.core_type<tc>, window_params = [{transform_indices = @transform_0, window_bounds = array<i64: 8, 128>}, {transform_indices = @transform_1, window_bounds = array<i64: 8, 128>}, {pipeline_mode = #tpu.pipeline_mode<synchronous>, transform_indices = @transform_2, window_bounds = array<i64: 8, 128>}, {transform_indices = @transform_3, window_bounds = array<i64: 8, 8>}, {transform_indices = @transform_4, window_bounds = array<i64: 1, 1, 128>}]} {
    %c0 = arith.constant 0 : index
    %c0_0 = arith.constant 0 : index
    %0 = vector.load %arg1[%c0, %c0_0] : memref<8x128xf32, #tpu.memory_space<vmem>>, vector<8x128xf32>
    %c0_1 = arith.constant 0 : index
    %c0_2 = arith.constant 0 : index
    %1 = vector.load %arg2[%c0_1, %c0_2] : memref<8x128xf32, #tpu.memory_space<vmem>>, vector<8x128xf32>
    %c0_3 = arith.constant 0 : index
    %c0_4 = arith.constant 0 : index
    %2 = vector.load %arg3[%c0_3, %c0_4] : memref<8x128xf32, #tpu.memory_space<vmem>>, vector<8x128xf32>
    %c0_5 = arith.constant 0 : index
    %c0_6 = arith.constant 0 : index
    %3 = vector.load %arg4[%c0_5, %c0_6] : memref<8x8xf32, #tpu.memory_space<vmem>>, vector<8x8xf32>
    %4 = arith.mulf %0, %0 : vector<8x128xf32>
    %cst = arith.constant dense<0.000000e+00> : vector<8xf32>
    %5 = vector.multi_reduction <add>, %4, %cst [1] : vector<8x128xf32> to vector<8xf32>
    %6 = vector.shape_cast %5 : vector<8xf32> to vector<8x1xf32>
    %cst_7 = arith.constant 1.000000e-24 : f32
    %7 = vector.broadcast %cst_7 : f32 to vector<8x1xf32>
    %8 = arith.maximumf %6, %7 : vector<8x1xf32>
    %9 = math.rsqrt %8 : vector<8x1xf32>
    %10 = vector.broadcast %9 : vector<8x1xf32> to vector<8x128xf32>
    %11 = arith.mulf %0, %10 : vector<8x128xf32>
    %12 = arith.mulf %1, %11 : vector<8x128xf32>
    %cst_8 = arith.constant dense<0.000000e+00> : vector<8xf32>
    %13 = vector.multi_reduction <add>, %12, %cst_8 [1] : vector<8x128xf32> to vector<8xf32>
    %14 = vector.shape_cast %13 : vector<8xf32> to vector<8x1xf32>
    %cst_9 = arith.constant dense<0.000000e+00> : vector<8x8xf32>
    %15 = tpu.matmul %1, %2, %cst_9 {dimension_numbers = #tpu.dot_dimension_numbers<[1], [1], [0], [0], [0, 0, 1, 0], [], []>} : vector<8x128xf32>, vector<8x128xf32>, vector<8x8xf32> -> vector<8x8xf32>
    %cst_10 = arith.constant 14.2857141 : f32
    %16 = vector.broadcast %cst_10 : f32 to vector<8x8xf32>
    %17 = arith.mulf %15, %16 : vector<8x8xf32>
    %cst_11 = arith.constant 14.2857141 : f32
    %18 = vector.broadcast %cst_11 : f32 to vector<8x8xf32>
    %19 = arith.subf %17, %18 : vector<8x8xf32>
    %20 = math.exp %19 : vector<8x8xf32>
    %21 = arith.mulf %3, %20 : vector<8x8xf32>
    %cst_12 = arith.constant dense<0.000000e+00> : vector<8xf32>
    %22 = vector.multi_reduction <add>, %21, %cst_12 [1] : vector<8x8xf32> to vector<8xf32>
    %23 = vector.shape_cast %22 : vector<8xf32> to vector<8x1xf32>
    %cst_13 = arith.constant 14.2857141 : f32
    %24 = vector.broadcast %cst_13 : f32 to vector<8x1xf32>
    %25 = arith.mulf %14, %24 : vector<8x1xf32>
    %cst_14 = arith.constant 14.2857141 : f32
    %26 = vector.broadcast %cst_14 : f32 to vector<8x1xf32>
    %27 = arith.subf %25, %26 : vector<8x1xf32>
    %28 = math.exp %27 : vector<8x1xf32>
    %29 = arith.addf %28, %23 : vector<8x1xf32>
    %30 = math.log %29 : vector<8x1xf32>
    %31 = arith.subf %27, %30 : vector<8x1xf32>
    %32 = vector.shape_cast %31 : vector<8x1xf32> to vector<1x8x1xf32>
    %cst_15 = arith.constant dense<0.000000e+00> : vector<1xf32>
    %33 = vector.multi_reduction <add>, %32, %cst_15 [1, 2] : vector<1x8x1xf32> to vector<1xf32>
    %34 = vector.shape_cast %33 : vector<1xf32> to vector<1x1x1xf32>
    %35 = vector.extract %34[0, 0, 0] : f32 from vector<1x1x1xf32>
    %36 = vector.broadcast %35 : f32 to vector<1x1x128xf32>
    %c0_16 = arith.constant 0 : index
    %c0_17 = arith.constant 0 : index
    %c0_18 = arith.constant 0 : index
    %37 = vector.load %arg5[%c0_16, %c0_17, %c0_18] : memref<1x1x128xf32, #tpu.memory_space<vmem>>, vector<1x1x128xf32>
    tpu.vector_store %arg5[%c0_16, %c0_17, %c0_18], %36 {strides = array<i32>} : memref<1x1x128xf32, #tpu.memory_space<vmem>>, vector<1x1x128xf32>,
    return
  }
  func.func @transform_0(%arg0: i32) -> (i32, i32) {
    %c0_i32 = arith.constant 0 : i32
    %c0_i32_0 = arith.constant 0 : i32
    return %arg0, %c0_i32 : i32, i32
  }
  func.func @transform_1(%arg0: i32) -> (i32, i32) {
    %c0_i32 = arith.constant 0 : i32
    %c0_i32_0 = arith.constant 0 : i32
    return %arg0, %c0_i32 : i32, i32
  }
  func.func @transform_2(%arg0: i32) -> (i32, i32) {
    %c0_i32 = arith.constant 0 : i32
    %c0_i32_0 = arith.constant 0 : i32
    %c0_i32_1 = arith.constant 0 : i32
    return %c0_i32, %c0_i32_0 : i32, i32
  }
  func.func @transform_3(%arg0: i32) -> (i32, i32) {
    %c0_i32 = arith.constant 0 : i32
    %c0_i32_0 = arith.constant 0 : i32
    return %arg0, %c0_i32 : i32, i32
  }
  func.func @transform_4(%arg0: i32) -> (i32, i32, i32) {
    %c0_i32 = arith.constant 0 : i32
    %c0_i32_0 = arith.constant 0 : i32
    %c0_i32_1 = arith.constant 0 : i32
    return %arg0, %c0_i32, %c0_i32_0 : i32, i32, i32
  }
}

</mosaic_0001>

<llo_original>
// kernel: av_sync_forward.1
$region0: #{av_sync_forward.1}
  #allocation0 [shape = 'u32[]', space=smem, size = 0x4, offset = 0x4, fixed_abs, tag = 'smem constant byte address 0x4 - core index']
  #allocation1 [shape = 'u32[72,128]{1,0:T(1,128)}', space=vmem, size = 0x9000, scoped, tag = 'internal scratch']
  %s0 = inlined_call_operand.vmem [shape: f32[8,128], index: 0, kind: input, shape index: {}]
  %s1 = inlined_call_operand.vmem [shape: f32[8,128], index: 1, kind: input, shape index: {}, may-alias: {1,2}]
  %s2 = inlined_call_operand.vmem [shape: f32[8,128], index: 2, kind: input, shape index: {}, may-alias: {1,2}]
  %s3 = inlined_call_operand.vmem [shape: f32[8,8], index: 3, kind: input, shape index: {}]
  %s4 = inlined_call_operand.vmem [shape: f32[1,1,128], index: 4, kind: output, shape index: {}]
  %s5 = sld [smem:[#allocation0]]
  $region26: #{av_sync_forward.1} parent=0
    _
  %s7 = ssub.s32 1, %s5
  %s8 = scalar_select 0, %s7, %s5
  // Predicated region
  $region2: #{av_sync_forward.1} parent=0 // pred_check
    _
  $region3: #{av_sync_forward.1} parent=0 // pred_check_branch
    %10 = sbr.rel (0) target = $region5
  $region4: #{av_sync_forward.1} parent=0 // pred_region
    _
  $region5: #{av_sync_forward.1} parent=0 // pred_fallthru
    _
  // Predicated region
  $region6: #{av_sync_forward.1} parent=0 // pred_check
    _
  $region7: #{av_sync_forward.1} parent=0 // pred_check_branch
    %12 = sbr.rel (0) target = $region9
  $region8: #{av_sync_forward.1} parent=0 // pred_region
    _
  $region9: #{av_sync_forward.1} parent=0 // pred_fallthru
    _
  // Predicated region
  $region10: #{av_sync_forward.1} parent=0 // pred_check
    _
  $region11: #{av_sync_forward.1} parent=0 // pred_check_branch
    %14 = sbr.rel (0) target = $region13
  $region12: #{av_sync_forward.1} parent=0 // pred_region
    _
  $region13: #{av_sync_forward.1} parent=0 // pred_fallthru
    _
  // Predicated region
  $region14: #{av_sync_forward.1} parent=0 // pred_check
    _
  $region15: #{av_sync_forward.1} parent=0 // pred_check_branch
    %16 = sbr.rel (0) target = $region17
  $region16: #{av_sync_forward.1} parent=0 // pred_region
    _
  $region17: #{av_sync_forward.1} parent=0 // pred_fallthru
    _
  %v17 = vld [vmem:[%s0] sm:$0xff]
  %v18 = vld [vmem:[%s1] sm:$0xff]
  %v19 = vld [vmem:[%s2] sm:$0xff]
  %v20 = vld [vmem:[%s3] sm:$0xff]
  %v21 = vmul.f32 %v17, %v17
  %22 = vadd.xlane.f32.xlu0 %v21
  %v23 = vpop.xlane.xlu0 %22
  %v24 = vmax.f32 %v23, 1e-24
  %v25 = vrsqrt.pop %v24
  %v26 = vmul.f32 %v25, %v24
  %v27 = vmul.f32 %v26, %v25
  %v28 = vmul.f32 0.5, %v27
  %v29 = vsub.f32 1.5, %v28
  %v30 = vmul.f32 %v25, %v29
  %vm31 = vweird.f32 %v24
  %vm32 = vweird.f32 %v25
  %vm33 = vmor %vm31, %vm32
  %v34 = vsel %vm33, %v25, %v30
  %v35 = vmul.f32 %v17, %v34
  %v36 = vmul.f32 %v18, %v35
  %37 = vadd.xlane.f32.xlu0 %v36
  %v38 = vpop.xlane.xlu0 %37
  %39 = vmatpush.xpose.msra.mxu0 0.0
  %40 = vmatpush.xpose.msra.mxu0 0.0
  %41 = vmatpush.xpose.msra.mxu0 0.0
  %42 = vmatpush.xpose.msra.mxu0 0.0
  %43 = vmatpush.xpose.msra.mxu0 0.0
  %44 = vmatpush.xpose.msra.mxu0 0.0
  %45 = vmatpush.xpose.msra.mxu0 0.0
  %46 = vmatpush.xpose.msra.mxu0 0.0
  %47 = vmatpush.xpose.msra.mxu0 0.0
  %48 = vmatpush.xpose.msra.mxu0 0.0
  %49 = vmatpush.xpose.msra.mxu0 0.0
  %50 = vmatpush.xpose.msra.mxu0 0.0
  %51 = vmatpush.xpose.msra.mxu0 0.0
  %52 = vmatpush.xpose.msra.mxu0 0.0
  %53 = vmatpush.xpose.msra.mxu0 0.0
  %54 = vmatpush.xpose.msra.mxu0 %v19
  %55 = vmatmul.f32.gmra.mxu0 %v18
  %v56 = vpop.f32.mrf.mxu0
  %v57 = vadd.f32 0.0, %v56
  %58 = vdwg.mxu0
  %v59 = vmul.f32 %v57, 14.285714
  %v60 = vsub.f32 %v59, 14.285714
  %v61 = vmul.f32 %v60, 1.442695
  %v62 = vpow.pop %v61
  %v63 = vmul.f32 %v20, %v62
  %vm64 = vcmask 64512
  %v65 = vsel %vm64, %v63, 0.0
  %66 = vadd.xlane.f32.xlu0 %v65
  %v67 = vpop.xlane.xlu0 %66
  %v68 = vmul.f32 %v38, 14.285714
  %v69 = vsub.f32 %v68, 14.285714
  %v70 = vmul.f32 %v69, 1.442695
  %v71 = vpow.pop %v70
  %v72 = vadd.f32 %v71, %v67
  %v73 = vlog2.pop %v72
  %v74 = vmul.f32 %v73, 0.6931472
  %v75 = vsub.f32 %v69, %v74
  %vm76 = vcmask 7168
  %v77 = vsel %vm76, %v75, 0.0
  %78 = vadd.xlane.f32.xlu0 %v77
  %v79 = vpop.xlane.xlu0 %78
  %v80 = vrot.slane %v79, 4
  %v81 = vadd.f32 %v79, %v80
  %v82 = vrot.slane %v81, 2
  %v83 = vadd.f32 %v81, %v82
  %v84 = vrot.slane %v83, 1
  %v85 = vadd.f32 %v83, %v84
  %s86 = vtos %v85
  %v87 = vstv %s86
  %88 = vst [vmem:[%s4] sm:$0x1] %v87
  // Predicated region
  $region18: #{av_sync_forward.1} parent=0 // pred_check
    _
  $region19: #{av_sync_forward.1} parent=0 // pred_check_branch
    %90 = sbr.rel (0) target = $region21
  $region20: #{av_sync_forward.1} parent=0 // pred_region
    _
  $region21: #{av_sync_forward.1} parent=0 // pred_fallthru
    _
  // Predicated region
  $region22: #{av_sync_forward.1} parent=0 // pred_check
    _
  $region23: #{av_sync_forward.1} parent=0 // pred_check_branch
    %92 = sbr.rel (0) target = $region25
  $region24: #{av_sync_forward.1} parent=0 // pred_region
    _
  $region25: #{av_sync_forward.1} parent=0 // pred_fallthru
    _

</llo_original>
